<compile_context>
chip_gen: v5e
topology: v5e:2x2
jax: 0.10.0
libtpu: 0.0.40
codegen_flags: <defaults>
</compile_context>

<pallas_src>
import math

import jax
import jax.numpy as jnp
from jax.experimental import pallas as pl
from jax.experimental.pallas import tpu as pltpu

ANGLE_TOLERANCE = 0.15
DELTA = 0.2

_LANES = 128                    # vreg lane width
_TILE_ROWS = 2048               # f32: 2048*128*4 B = 1 MiB per block
_MIN_PALLAS_ELEMS = 64 * 1024   # below this, fused XLA elementwise wins


def _round_up(x, m):
    return ((x + m - 1) // m) * m


def zero_act_kernel(x_ref, o_ref):
    # |x| > tol  =>  x - delta*sign(x); else 0.  On the masked region x != 0,
    # so where(x > 0, +d, -d) == delta * sign(x).  The kernel is HBM-bound:
    # these few VALU ops per vreg are free filler under the streaming DMA.
    x = x_ref[...].astype(jnp.float32)
    signed_delta = jnp.where(x > 0, jnp.float32(DELTA), jnp.float32(-DELTA))
    out = jnp.where(jnp.abs(x) > jnp.float32(ANGLE_TOLERANCE), x - signed_delta, 0.0)
    o_ref[...] = out.astype(o_ref.dtype)


def zero_act_reference(dof_pos):
    # Pure-JAX reference mirroring the PyTorch module (also the small-input path).
    mask = jnp.abs(dof_pos) > ANGLE_TOLERANCE
    return jnp.where(mask, dof_pos - DELTA * jnp.sign(dof_pos), jnp.zeros_like(dof_pos))


def zero_act_model(dof_pos, tile_rows=_TILE_ROWS, min_pallas_elems=_MIN_PALLAS_ELEMS):
    """Pallas implementation of ZeroActModel.forward for arbitrary-shape input."""
    orig_shape = dof_pos.shape
    orig_dtype = dof_pos.dtype
    total = math.prod(orig_shape)

    # At real robot-control sizes a standalone pallas_call is pure launch
    # overhead -- let XLA fuse the elementwise op instead.
    if total < min_pallas_elems:
        return zero_act_reference(dof_pos)

    # Sublane packing multiple for this dtype: f32 -> 8, bf16 -> 16, int8 -> 32.
    itemsize = jnp.dtype(orig_dtype).itemsize
    sub = max(8, 32 // itemsize)

    flat = jnp.ravel(dof_pos)

    # Lane-dense repack.  Fast path: total already a multiple of 128 lanes, so
    # the reshapes in/out are free bitcasts -- no pad, no trailing slice.
    if total % _LANES == 0:
        rows = total // _LANES
        slab = flat.reshape(rows, _LANES)
        trim = None
    else:
        rows = pl.cdiv(total, _LANES)                 # minimal pad: < 128 elems
        slab = jnp.pad(flat, (0, rows * _LANES - total)).reshape(rows, _LANES)
        trim = total

    # Tile sizing: ~1 MiB blocks amortize per-grid-step overhead; keep >= 2
    # tiles when possible so v7x's two TensorCores both get work.  The last
    # block may be ragged (Pallas bounds it) -- never pad to num_tiles * tr.
    if rows > tile_rows:
        tr = tile_rows
    else:
        half = _round_up(pl.cdiv(rows, 2), sub)
        tr = half if half < rows else rows            # full-extent block if tiny
    num_tiles = pl.cdiv(rows, tr)

    # TODO(synk): in the no-pad fast path input_output_aliases={0: 0} could let
    # XLA reuse the input buffer, but callers typically still need dof_pos.
    out_slab = pl.pallas_call(
        zero_act_kernel,
        out_shape=jax.ShapeDtypeStruct((rows, _LANES), orig_dtype),
        grid=(num_tiles,),
        in_specs=[pl.BlockSpec((tr, _LANES), lambda i: (i, 0))],
        out_specs=pl.BlockSpec((tr, _LANES), lambda i: (i, 0)),
        compiler_params=pltpu.CompilerParams(
            dimension_semantics=("parallel",),
        ),
    )(slab)

    if trim is None:
        return out_slab.reshape(orig_shape)
    return out_slab.reshape(-1)[:trim].reshape(orig_shape)


if __name__ == "__main__":
    key = jax.random.PRNGKey(0)
    k1, k2, k3 = jax.random.split(key, 3)

    # 1) Production-sized Go2 input (12 joint DOFs, tiny batch): dispatches to
    #    the fused pure-JAX path.
    dof_small = jax.random.uniform(
        k1, (2, 12), dtype=jnp.float32, minval=-0.5, maxval=0.5)
    out_small = zero_act_model(dof_small)
    jax.block_until_ready(out_small)
    ref_small = zero_act_reference(dof_small)
    assert out_small.shape == dof_small.shape and out_small.dtype == dof_small.dtype
    assert jnp.allclose(out_small, ref_small, atol=1e-6)

    # 2) Small shapes forced through the Pallas path to validate both the
    #    128-aligned fast path and the padded remainder fallback.
    dof_aligned = jax.random.uniform(
        k2, (32, 12), dtype=jnp.float32, minval=-0.5, maxval=0.5)  # 384 elems, aligned
    out_aligned = zero_act_model(dof_aligned, min_pallas_elems=0)
    jax.block_until_ready(out_aligned)
    assert jnp.allclose(out_aligned, zero_act_reference(dof_aligned), atol=1e-6)

    out_pad = zero_act_model(dof_small, min_pallas_elems=0)        # 24 elems, pad path
    jax.block_until_ready(out_pad)
    assert out_pad.shape == dof_small.shape
    assert jnp.allclose(out_pad, ref_small, atol=1e-6)

    # 3) Large batch: 8192*12 = 98304 elems = 768 lane-dense rows, no padding,
    #    2 pipelined tiles of 384 rows each ("parallel" grid axis).
    dof_big = jax.random.uniform(
        k3, (8192, 12), dtype=jnp.float32, minval=-0.5, maxval=0.5)
    out_big = zero_act_model(dof_big)
    jax.block_until_ready(out_big)
    assert out_big.shape == dof_big.shape and out_big.dtype == dof_big.dtype
    assert jnp.allclose(out_big, zero_act_reference(dof_big), atol=1e-6)

    # 4) bf16 dtype handling (kernel computes in f32, casts on store).
    dof_bf16 = dof_big.astype(jnp.bfloat16)
    out_bf16 = zero_act_model(dof_bf16)
    jax.block_until_ready(out_bf16)
    ref_bf16 = zero_act_reference(dof_bf16.astype(jnp.float32)).astype(jnp.bfloat16)
    assert out_bf16.dtype == jnp.bfloat16 and out_bf16.shape == dof_bf16.shape
    assert jnp.allclose(out_bf16.astype(jnp.float32),
                        ref_bf16.astype(jnp.float32), atol=2e-2)

    print("KERNEL_OK")
</pallas_src>

<mosaic_0001>
module attributes {stable_mosaic.version = 11 : i64} {
  func.func @zero_act_kernel(%arg0: i32, %arg1: memref<3x128xf32, #tpu.memory_space<vmem>>, %arg2: memref<3x128xf32, #tpu.memory_space<vmem>>) attributes {dimension_semantics = [#tpu.dimension_semantics<parallel>], iteration_bounds = array<i64: 1>, scalar_prefetch = 0 : i64, scratch_operands = 0 : i64, tpu.core_type = #tpu.core_type<tc>, window_params = [{transform_indices = @transform_0, window_bounds = array<i64: 3, 128>}, {transform_indices = @transform_1, window_bounds = array<i64: 3, 128>}]} {
    %c0 = arith.constant 0 : index
    %c0_0 = arith.constant 0 : index
    %0 = vector.load %arg1[%c0, %c0_0] : memref<3x128xf32, #tpu.memory_space<vmem>>, vector<3x128xf32>
    %cst = arith.constant 0.000000e+00 : f32
    %1 = vector.broadcast %cst : f32 to vector<3x128xf32>
    %2 = arith.cmpf ogt, %0, %1 : vector<3x128xf32>
    %cst_1 = arith.constant 2.000000e-01 : f32
    %cst_2 = arith.constant -2.000000e-01 : f32
    %3 = vector.broadcast %cst_1 : f32 to vector<3x128xf32>
    %4 = vector.broadcast %cst_2 : f32 to vector<3x128xf32>
    %5 = arith.select %2, %3, %4 : vector<3x128xi1>, vector<3x128xf32>
    %6 = math.absf %0 : vector<3x128xf32>
    %cst_3 = arith.constant 1.500000e-01 : f32
    %7 = vector.broadcast %cst_3 : f32 to vector<3x128xf32>
    %8 = arith.cmpf ogt, %6, %7 : vector<3x128xf32>
    %9 = arith.subf %0, %5 : vector<3x128xf32>
    %cst_4 = arith.constant 0.000000e+00 : f32
    %10 = vector.broadcast %cst_4 : f32 to vector<3x128xf32>
    %11 = arith.select %8, %9, %10 : vector<3x128xi1>, vector<3x128xf32>
    %c0_5 = arith.constant 0 : index
    %c0_6 = arith.constant 0 : index
    %12 = vector.load %arg2[%c0_5, %c0_6] : memref<3x128xf32, #tpu.memory_space<vmem>>, vector<3x128xf32>
    tpu.vector_store %arg2[%c0_5, %c0_6], %11 {strides = array<i32>} : memref<3x128xf32, #tpu.memory_space<vmem>>, vector<3x128xf32>,
    return
  }
  func.func @transform_0(%arg0: i32) -> (i32, i32) {
    %c0_i32 = arith.constant 0 : i32
    %c0_i32_0 = arith.constant 0 : i32
    return %arg0, %c0_i32 : i32, i32
  }
  func.func @transform_1(%arg0: i32) -> (i32, i32) {
    %c0_i32 = arith.constant 0 : i32
    %c0_i32_0 = arith.constant 0 : i32
    return %arg0, %c0_i32 : i32, i32
  }
}

</mosaic_0001>

<llo_original>
// kernel: tpu_custom_call.1
$region0: #{tpu_custom_call.1}
  #allocation0 [shape = 'u32[]', space=smem, size = 0x4, offset = 0x4, fixed_abs, tag = 'smem constant byte address 0x4 - core index']
  #allocation1 [shape = 'u32[72,128]{1,0:T(1,128)}', space=vmem, size = 0x9000, scoped, tag = 'internal scratch']
  %s0 = inlined_call_operand.hbm [shape: f32[3,128], index: 0, kind: input, shape index: {}]
  %s1 = inlined_call_operand.hbm [shape: f32[3,128], index: 1, kind: output, shape index: {}]
  %s2 = sld [smem:[#allocation0]]
  $region18: #{tpu_custom_call.1} parent=0
    _
  %s4 = ssub.s32 1, %s2
  %s5 = scalar_select 0, %s4, %s2
  $region1: #{tpu_custom_call.1} parent=0
    #allocation2 [shape = 'u8[2048]{0}', space=vmem, size = 0x800, scoped, tag = 'input window, operand 0, single buffered']
    #allocation3 [shape = 's32[1]{0}', space=sflag, size = 0x4, scoped, tag = 'scoped memory for tpu_custom_call.1']
    #allocation4 [shape = 's32[1]{0}', space=sflag, size = 0x4, scoped, tag = 'scoped memory for tpu_custom_call.1']
    #allocation5 [shape = 'u8[2048]{0}', space=vmem, size = 0x800, scoped, tag = 'output window, operand 0, single buffered']
    %6 = vsyncpa [#allocation3], 0
    %7 = vsyncpa [#allocation4], 0
    // Predicated region
    $region2: #{tpu_custom_call.1} parent=1 // pred_check
      _
    $region3: #{tpu_custom_call.1} parent=1 // pred_check_branch
      %9 = sbr.rel (0) target = $region5
    $region4: #{tpu_custom_call.1} parent=1 // pred_region
      %11 = vsyncadd [#allocation3], 0
      %s13 = sshll.u32 %s0, 4
      %s14 = int_to_ptr.hbm [resolvable:$true] %s13
      %s15 = sshll.u32 [#allocation2], 4
      %s16 = int_to_ptr.vmem [resolvable:$true] %s15
      %18 = dma.hbm_to_vmem [thread:$0]  %s14, 64, %s16, [#allocation3]
    $region5: #{tpu_custom_call.1} parent=1 // pred_fallthru
      _
    // Predicated region
    $region6: #{tpu_custom_call.1} parent=1 // pred_check
      _
    $region7: #{tpu_custom_call.1} parent=1 // pred_check_branch
      %20 = sbr.rel (0) target = $region9
    $region8: #{tpu_custom_call.1} parent=1 // pred_region
      %22 = dma.done [#allocation3], 64
    $region9: #{tpu_custom_call.1} parent=1 // pred_fallthru
      _
    %v23 = vld [vmem:[#allocation2] sm:$0x7]
    %vm24 = vcmp.gt.f32.partialorder %v23, 0.0
    %v25 = vsel %vm24, 0.2, -0.2
    %v26 = vand.u32 2147483647, %v23
    %vm27 = vcmp.gt.f32.partialorder %v26, 0.15
    %v28 = vsub.f32 %v23, %v25
    %v29 = vsel %vm27, %v28, 0.0
    %30 = vst [vmem:[#allocation5] sm:$0x7] %v29
    // Predicated region
    $region10: #{tpu_custom_call.1} parent=1 // pred_check
      _
    $region11: #{tpu_custom_call.1} parent=1 // pred_check_branch
      %32 = sbr.rel (0) target = $region13
    $region12: #{tpu_custom_call.1} parent=1 // pred_region
      %34 = vsyncadd [#allocation4], 0
      %s36 = sshll.u32 [#allocation5], 4
      %s37 = int_to_ptr.vmem [resolvable:$true] %s36
      %s38 = sshll.u32 %s1, 4
      %s39 = int_to_ptr.hbm [resolvable:$true] %s38
      %41 = dma.vmem_to_hbm [thread:$0]  %s37, 64, %s39, [#allocation4]
    $region13: #{tpu_custom_call.1} parent=1 // pred_fallthru
      _
    // Predicated region
    $region14: #{tpu_custom_call.1} parent=1 // pred_check
      _
    $region15: #{tpu_custom_call.1} parent=1 // pred_check_branch
      %43 = sbr.rel (0) target = $region17
    $region16: #{tpu_custom_call.1} parent=1 // pred_region
      %45 = dma.done [#allocation4], 64
    $region17: #{tpu_custom_call.1} parent=1 // pred_fallthru
      _
    %46 = vsyncpa [#allocation3], 1
    %47 = vsyncpa [#allocation4], 1

</llo_original>
